<compile_context>
chip_gen: v5e
topology: v5e:2x2
jax: 0.10.0
libtpu: 0.0.40
codegen_flags: <defaults>
</compile_context>

<pallas_src>
import functools

import jax
import jax.numpy as jnp
from jax import lax
from jax.experimental import pallas as pl
from jax.experimental.pallas import tpu as pltpu


def _dist_partials_kernel(zs_ref, zt_ref, out_ref, *,
                          tau, eps, B, C, TB, tiles_per_split, mask_rows):
    s = pl.program_id(0)          # batch split (maps to a TensorCore on v7x)
    i = pl.program_id(1)          # row tile within the split (reduction axis)

    @pl.when(i == 0)
    def _init():
        out_ref[...] = jnp.zeros_like(out_ref)

    f32 = jnp.float32
    inv_tau = f32(1.0 / tau)
    inv_c = f32(1.0 / C)

    zs = zs_ref[...].astype(f32) * inv_tau
    zt = zt_ref[...].astype(f32) * inv_tau

    ones_c = jnp.ones((C, 1), f32)     # row sums via MXU
    ones_r = jnp.ones((1, TB), f32)    # column sums via MXU

    # Row softmax. Row maxima stay on the XLU; row sums ride the MXU.
    es = jnp.exp(zs - jnp.max(zs, axis=1, keepdims=True))
    et = jnp.exp(zt - jnp.max(zt, axis=1, keepdims=True))
    ps = es * (1.0 / jnp.dot(es, ones_c, preferred_element_type=f32))
    pt = et * (1.0 / jnp.dot(et, ones_c, preferred_element_type=f32))

    # Shift by the exact per-row mean (softmax rows sum to 1 -> mean == 1/C).
    # Pearson is shift-invariant, so this centers both terms (reducing f32
    # raw-moment cancellation in the intra term) and lets padded rows be zeroed
    # so they contribute nothing to either term.
    a = ps - inv_c
    b = pt - inv_c
    if mask_rows:
        row = ((s * tiles_per_split + i) * TB
               + lax.broadcasted_iota(jnp.int32, (TB, 1), 0))
        valid = row < B
        a = jnp.where(valid, a, 0.0)   # also wipes NaN/Inf from padded rows
        b = jnp.where(valid, b, 0.0)

    ab = a * b
    aa = a * a
    bb = b * b

    # ---- inter term: per-row Pearson over classes (row moments via MXU) ----
    sab = jnp.dot(ab, ones_c, preferred_element_type=f32)   # (TB, 1)
    saa = jnp.dot(aa, ones_c, preferred_element_type=f32)
    sbb = jnp.dot(bb, ones_c, preferred_element_type=f32)
    # NOTE eps placement: sqrt(va*vb)+eps == sqrt(va)*sqrt(vb)+eps up to fp
    # rounding near zero variance; matches the reference within tolerance.
    corr = sab / (jnp.sqrt(saa * sbb) + eps)                 # masked rows -> 0
    inter_tile = jnp.sum(corr, axis=0, keepdims=True)        # (1, 1)

    # ---- intra term: per-class column moments, streamed (MXU column sums) --
    col_a = jnp.dot(ones_r, a, preferred_element_type=f32)   # (1, C)
    col_b = jnp.dot(ones_r, b, preferred_element_type=f32)
    col_ab = jnp.dot(ones_r, ab, preferred_element_type=f32)
    col_aa = jnp.dot(ones_r, aa, preferred_element_type=f32)
    col_bb = jnp.dot(ones_r, bb, preferred_element_type=f32)

    upd = jnp.concatenate(
        [col_a, col_b, col_ab, col_aa, col_bb,
         jnp.broadcast_to(inter_tile, (1, C)),
         jnp.zeros((2, C), f32)], axis=0)                    # (8, C)
    out_ref[...] += upd[None]


def _round_up(x, m):
    return ((x + m - 1) // m) * m


def _vmem_limit_bytes():
    cap = 64 * 1024 * 1024
    try:
        info = pltpu.get_tpu_info()
        cap = int(getattr(info, "vmem_capacity_bytes", cap) or cap)
    except Exception:
        pass
    # ~96 MiB on 128 MiB parts (v5e/v6e), ~48 MiB on 64 MiB parts (v7x).
    return int(min(cap * 3 // 4, 96 * 1024 * 1024))


def _pick_block_rows(B, C, itemsize, vmem_limit):
    # Live VMEM per TB-row strip:
    #   2 inputs x 2 pipeline buffers at the input dtype
    #   + ~12 compiler-materialized f32 (TB, C) intermediates.
    per_row = C * (2 * 2 * itemsize + 12 * 4)
    rows = int(vmem_limit * 0.85) // max(per_row, 1)
    rows = max(8, min(rows, 4096))
    return (rows // 8) * 8


def dist_loss(z_s, z_t, beta=1.0, gamma=1.0, tau=1.0, eps=1e-8,
              block_rows=None):
    assert z_s.shape == z_t.shape and z_s.ndim == 2
    B, C = z_s.shape
    itemsize = jnp.dtype(z_s.dtype).itemsize
    vmem_limit = _vmem_limit_bytes()

    if block_rows is None:
        tb_max = _pick_block_rows(B, C, itemsize, vmem_limit)
    else:
        tb_max = max(8, (int(block_rows) // 8) * 8)

    # Tile/split selection: keep (8, 128) sublane alignment and prefer an even
    # number of row tiles so the batch splits cleanly across both TensorCores
    # on v7x without overlap or fully out-of-bounds blocks.
    if B <= 8:
        TB = B                                  # single, full-dim block
    else:
        raw_blocks = pl.cdiv(B, tb_max)
        target = max(raw_blocks + (raw_blocks % 2), 2)
        TB = min(_round_up(pl.cdiv(B, target), 8), tb_max)
    nblocks = pl.cdiv(B, TB)
    num_splits = 2 if (nblocks >= 2 and nblocks % 2 == 0) else 1
    tiles_per_split = nblocks // num_splits
    mask_rows = (B % TB) != 0

    # TODO(synk): vocab-scale C (class dim bigger than a VMEM tile) would also
    # need class-axis tiling; for extreme B a Chan-style per-tile-centered
    # moment merge would further harden the intra term against cancellation.

    kernel = functools.partial(
        _dist_partials_kernel, tau=float(tau), eps=float(eps), B=B, C=C,
        TB=TB, tiles_per_split=tiles_per_split, mask_rows=mask_rows)

    grid_spec = pltpu.PrefetchScalarGridSpec(
        num_scalar_prefetch=0,
        grid=(num_splits, tiles_per_split),
        in_specs=[
            pl.BlockSpec((TB, C), lambda s, i: (s * tiles_per_split + i, 0)),
            pl.BlockSpec((TB, C), lambda s, i: (s * tiles_per_split + i, 0)),
        ],
        # One resident (1, 8, C) accumulator block per split:
        # rows 0..4 = sum a, sum b, sum ab, sum a^2, sum b^2; row 5 = inter sum.
        out_specs=pl.BlockSpec((1, 8, C), lambda s, i: (s, 0, 0)),
    )

    partials = pl.pallas_call(
        kernel,
        out_shape=jax.ShapeDtypeStruct((num_splits, 8, C), jnp.float32),
        grid_spec=grid_spec,
        compiler_params=pltpu.CompilerParams(
            dimension_semantics=("parallel", "arbitrary"),
            vmem_limit_bytes=vmem_limit),
        cost_estimate=pl.CostEstimate(
            flops=40 * B * C,
            transcendentals=2 * B * C,
            bytes_accessed=2 * B * C * itemsize + num_splits * 8 * C * 4),
    )(z_s, z_t)

    # ---- tiny finalize / split-merge in plain JAX (O(C) work) --------------
    m = jnp.sum(partials, axis=0)          # (8, C)
    nB = jnp.float32(B)
    S, T, ST, SS, TT = m[0], m[1], m[2], m[3], m[4]
    inter_corr_mean = m[5, 0] / nB

    cov = ST - S * T / nB
    var_s = jnp.maximum(SS - S * S / nB, 0.0)
    var_t = jnp.maximum(TT - T * T / nB, 0.0)
    corr_c = cov / (jnp.sqrt(var_s) * jnp.sqrt(var_t) + eps)
    intra_corr_mean = jnp.mean(corr_c)

    tau2 = jnp.float32(tau * tau)
    return (beta * tau2 * (1.0 - inter_corr_mean)
            + gamma * tau2 * (1.0 - intra_corr_mean))


# ------------------------- pure-JAX reference -------------------------------
def _ref_dist(z_s, z_t, beta=1.0, gamma=1.0, tau=1.0, eps=1e-8):
    y_s = jax.nn.softmax(z_s / tau, axis=1)
    y_t = jax.nn.softmax(z_t / tau, axis=1)

    def pearson_mean(a, b):
        a = a - a.mean(1, keepdims=True)
        b = b - b.mean(1, keepdims=True)
        num = (a * b).sum(1)
        den = jnp.linalg.norm(a, axis=1) * jnp.linalg.norm(b, axis=1) + eps
        return (num / den).mean()

    inter = 1.0 - pearson_mean(y_s, y_t)
    intra = 1.0 - pearson_mean(y_s.T, y_t.T)
    return beta * tau ** 2 * inter + gamma * tau ** 2 * intra


if __name__ == "__main__":
    key = jax.random.PRNGKey(0)
    k1, k2, k3, k4, k5, k6 = jax.random.split(key, 6)

    # Case 1: multi-tile, even tile count -> 2-way split (both TCs on v7x),
    # no masking (B % TB == 0).
    B1, C1 = 32, 128
    zs1 = jax.random.normal(k1, (B1, C1), dtype=jnp.float32)
    zt1 = jax.random.normal(k2, (B1, C1), dtype=jnp.float32)
    out1 = jax.block_until_ready(dist_loss(zs1, zt1, block_rows=8))
    ref1 = _ref_dist(zs1, zt1)
    assert jnp.allclose(out1, ref1, atol=1e-5, rtol=1e-5), (out1, ref1)

    # Case 2: ragged batch with even tile count -> split + masked last tile,
    # non-128 class count.
    B2, C2 = 28, 40
    zs2 = jax.random.normal(k3, (B2, C2), dtype=jnp.float32)
    zt2 = jax.random.normal(k4, (B2, C2), dtype=jnp.float32)
    out2 = jax.block_until_ready(
        dist_loss(zs2, zt2, beta=2.0, gamma=0.5, tau=2.0, block_rows=8))
    ref2 = _ref_dist(zs2, zt2, beta=2.0, gamma=0.5, tau=2.0)
    assert jnp.allclose(out2, ref2, atol=1e-5, rtol=1e-5), (out2, ref2)

    # Case 3: odd tile count -> single-split fallback, masked last tile.
    B3, C3 = 20, 40
    zs3 = jax.random.normal(k5, (B3, C3), dtype=jnp.float32)
    zt3 = jax.random.normal(k6, (B3, C3), dtype=jnp.float32)
    out3 = jax.block_until_ready(
        dist_loss(zs3, zt3, beta=1.0, gamma=1.5, tau=4.0, block_rows=8))
    ref3 = _ref_dist(zs3, zt3, beta=1.0, gamma=1.5, tau=4.0)
    assert jnp.allclose(out3, ref3, atol=1e-5, rtol=1e-5), (out3, ref3)

    # Case 4: auto tile size + bf16 logits (halves HBM traffic on the
    # bandwidth-bound v5e/v6e path; kernel upcasts to f32 internally).
    zs4 = zs1.astype(jnp.bfloat16)
    zt4 = zt1.astype(jnp.bfloat16)
    out4 = jax.block_until_ready(dist_loss(zs4, zt4))
    ref4 = _ref_dist(zs4.astype(jnp.float32), zt4.astype(jnp.float32))
    assert jnp.allclose(out4, ref4, atol=1e-5, rtol=1e-5), (out4, ref4)

    print("KERNEL_OK")
</pallas_src>

<mosaic_0001>
module attributes {stable_mosaic.version = 11 : i64} {
  func.func @_dist_partials_kernel(%arg0: i32, %arg1: i32, %arg2: memref<8x128xf32, #tpu.memory_space<vmem>>, %arg3: memref<8x128xf32, #tpu.memory_space<vmem>>, %arg4: memref<1x8x128xf32, #tpu.memory_space<vmem>>) attributes {dimension_semantics = [#tpu.dimension_semantics<parallel>, #tpu.dimension_semantics<arbitrary>], iteration_bounds = array<i64: 2, 2>, scalar_prefetch = 0 : i64, scratch_operands = 0 : i64, tpu.core_type = #tpu.core_type<tc>, window_params = [{transform_indices = @transform_0, window_bounds = array<i64: 8, 128>}, {transform_indices = @transform_1, window_bounds = array<i64: 8, 128>}, {transform_indices = @transform_2, window_bounds = array<i64: 1, 8, 128>}]} {
    %c0_i32 = arith.constant 0 : i32
    %0 = arith.cmpi eq, %arg1, %c0_i32 : i32
    %1 = arith.extui %0 : i1 to i32
    %c0_i32_0 = arith.constant 0 : i32
    %2 = arith.cmpi ne, %1, %c0_i32_0 : i32
    scf.if %2 {
      %cst_32 = arith.constant 0.000000e+00 : f32
      %61 = vector.broadcast %cst_32 : f32 to vector<1x8x128xf32>
      %c0_33 = arith.constant 0 : index
      %c0_34 = arith.constant 0 : index
      %c0_35 = arith.constant 0 : index
      %62 = vector.load %arg4[%c0_33, %c0_34, %c0_35] : memref<1x8x128xf32, #tpu.memory_space<vmem>>, vector<1x8x128xf32>
      tpu.vector_store %arg4[%c0_33, %c0_34, %c0_35], %61 {strides = array<i32>} : memref<1x8x128xf32, #tpu.memory_space<vmem>>, vector<1x8x128xf32>,
    } else {
    }
    %c0 = arith.constant 0 : index
    %c0_1 = arith.constant 0 : index
    %3 = vector.load %arg2[%c0, %c0_1] : memref<8x128xf32, #tpu.memory_space<vmem>>, vector<8x128xf32>
    %cst = arith.constant 1.000000e+00 : f32
    %4 = vector.broadcast %cst : f32 to vector<8x128xf32>
    %5 = arith.mulf %3, %4 : vector<8x128xf32>
    %c0_2 = arith.constant 0 : index
    %c0_3 = arith.constant 0 : index
    %6 = vector.load %arg3[%c0_2, %c0_3] : memref<8x128xf32, #tpu.memory_space<vmem>>, vector<8x128xf32>
    %cst_4 = arith.constant 1.000000e+00 : f32
    %7 = vector.broadcast %cst_4 : f32 to vector<8x128xf32>
    %8 = arith.mulf %6, %7 : vector<8x128xf32>
    %cst_5 = arith.constant 1.000000e+00 : f32
    %9 = vector.broadcast %cst_5 : f32 to vector<128x1xf32>
    %cst_6 = arith.constant 1.000000e+00 : f32
    %10 = vector.broadcast %cst_6 : f32 to vector<1x8xf32>
    %cst_7 = arith.constant dense<0xFF800000> : vector<8xf32>
    %11 = vector.multi_reduction <maximumf>, %5, %cst_7 [1] : vector<8x128xf32> to vector<8xf32>
    %12 = vector.shape_cast %11 : vector<8xf32> to vector<8x1xf32>
    %13 = vector.broadcast %12 : vector<8x1xf32> to vector<8x128xf32>
    %14 = arith.subf %5, %13 : vector<8x128xf32>
    %15 = math.exp %14 : vector<8x128xf32>
    %cst_8 = arith.constant dense<0xFF800000> : vector<8xf32>
    %16 = vector.multi_reduction <maximumf>, %8, %cst_8 [1] : vector<8x128xf32> to vector<8xf32>
    %17 = vector.shape_cast %16 : vector<8xf32> to vector<8x1xf32>
    %18 = vector.broadcast %17 : vector<8x1xf32> to vector<8x128xf32>
    %19 = arith.subf %8, %18 : vector<8x128xf32>
    %20 = math.exp %19 : vector<8x128xf32>
    %cst_9 = arith.constant dense<0.000000e+00> : vector<8x1xf32>
    %21 = tpu.matmul %15, %9, %cst_9 {dimension_numbers = #tpu.dot_dimension_numbers<[1], [0], [0], [1], [0, 0, 1, 1], [], []>} : vector<8x128xf32>, vector<128x1xf32>, vector<8x1xf32> -> vector<8x1xf32>
    %cst_10 = arith.constant 1.000000e+00 : f32
    %22 = vector.broadcast %cst_10 : f32 to vector<8x1xf32>
    %23 = arith.divf %22, %21 : vector<8x1xf32>
    %24 = vector.broadcast %23 : vector<8x1xf32> to vector<8x128xf32>
    %25 = arith.mulf %15, %24 : vector<8x128xf32>
    %cst_11 = arith.constant dense<0.000000e+00> : vector<8x1xf32>
    %26 = tpu.matmul %20, %9, %cst_11 {dimension_numbers = #tpu.dot_dimension_numbers<[1], [0], [0], [1], [0, 0, 1, 1], [], []>} : vector<8x128xf32>, vector<128x1xf32>, vector<8x1xf32> -> vector<8x1xf32>
    %cst_12 = arith.constant 1.000000e+00 : f32
    %27 = vector.broadcast %cst_12 : f32 to vector<8x1xf32>
    %28 = arith.divf %27, %26 : vector<8x1xf32>
    %29 = vector.broadcast %28 : vector<8x1xf32> to vector<8x128xf32>
    %30 = arith.mulf %20, %29 : vector<8x128xf32>
    %cst_13 = arith.constant 7.812500e-03 : f32
    %31 = vector.broadcast %cst_13 : f32 to vector<8x128xf32>
    %32 = arith.subf %25, %31 : vector<8x128xf32>
    %cst_14 = arith.constant 7.812500e-03 : f32
    %33 = vector.broadcast %cst_14 : f32 to vector<8x128xf32>
    %34 = arith.subf %30, %33 : vector<8x128xf32>
    %35 = arith.mulf %32, %34 : vector<8x128xf32>
    %36 = arith.mulf %32, %32 : vector<8x128xf32>
    %37 = arith.mulf %34, %34 : vector<8x128xf32>
    %cst_15 = arith.constant dense<0.000000e+00> : vector<8x1xf32>
    %38 = tpu.matmul %35, %9, %cst_15 {dimension_numbers = #tpu.dot_dimension_numbers<[1], [0], [0], [1], [0, 0, 1, 1], [], []>} : vector<8x128xf32>, vector<128x1xf32>, vector<8x1xf32> -> vector<8x1xf32>
    %cst_16 = arith.constant dense<0.000000e+00> : vector<8x1xf32>
    %39 = tpu.matmul %36, %9, %cst_16 {dimension_numbers = #tpu.dot_dimension_numbers<[1], [0], [0], [1], [0, 0, 1, 1], [], []>} : vector<8x128xf32>, vector<128x1xf32>, vector<8x1xf32> -> vector<8x1xf32>
    %cst_17 = arith.constant dense<0.000000e+00> : vector<8x1xf32>
    %40 = tpu.matmul %37, %9, %cst_17 {dimension_numbers = #tpu.dot_dimension_numbers<[1], [0], [0], [1], [0, 0, 1, 1], [], []>} : vector<8x128xf32>, vector<128x1xf32>, vector<8x1xf32> -> vector<8x1xf32>
    %41 = arith.mulf %39, %40 : vector<8x1xf32>
    %42 = math.sqrt %41 : vector<8x1xf32>
    %cst_18 = arith.constant 9.99999993E-9 : f32
    %43 = vector.broadcast %cst_18 : f32 to vector<8x1xf32>
    %44 = arith.addf %42, %43 : vector<8x1xf32>
    %45 = arith.divf %38, %44 : vector<8x1xf32>
    %cst_19 = arith.constant dense<0.000000e+00> : vector<1xf32>
    %46 = vector.multi_reduction <add>, %45, %cst_19 [0] : vector<8x1xf32> to vector<1xf32>
    %47 = vector.shape_cast %46 : vector<1xf32> to vector<1x1xf32>
    %cst_20 = arith.constant dense<0.000000e+00> : vector<1x128xf32>
    %48 = tpu.matmul %10, %32, %cst_20 {dimension_numbers = #tpu.dot_dimension_numbers<[1], [0], [0], [1], [0, 0, 1, 1], [], []>} : vector<1x8xf32>, vector<8x128xf32>, vector<1x128xf32> -> vector<1x128xf32>
    %cst_21 = arith.constant dense<0.000000e+00> : vector<1x128xf32>
    %49 = tpu.matmul %10, %34, %cst_21 {dimension_numbers = #tpu.dot_dimension_numbers<[1], [0], [0], [1], [0, 0, 1, 1], [], []>} : vector<1x8xf32>, vector<8x128xf32>, vector<1x128xf32> -> vector<1x128xf32>
    %cst_22 = arith.constant dense<0.000000e+00> : vector<1x128xf32>
    %50 = tpu.matmul %10, %35, %cst_22 {dimension_numbers = #tpu.dot_dimension_numbers<[1], [0], [0], [1], [0, 0, 1, 1], [], []>} : vector<1x8xf32>, vector<8x128xf32>, vector<1x128xf32> -> vector<1x128xf32>
    %cst_23 = arith.constant dense<0.000000e+00> : vector<1x128xf32>
    %51 = tpu.matmul %10, %36, %cst_23 {dimension_numbers = #tpu.dot_dimension_numbers<[1], [0], [0], [1], [0, 0, 1, 1], [], []>} : vector<1x8xf32>, vector<8x128xf32>, vector<1x128xf32> -> vector<1x128xf32>
    %cst_24 = arith.constant dense<0.000000e+00> : vector<1x128xf32>
    %52 = tpu.matmul %10, %37, %cst_24 {dimension_numbers = #tpu.dot_dimension_numbers<[1], [0], [0], [1], [0, 0, 1, 1], [], []>} : vector<1x8xf32>, vector<8x128xf32>, vector<1x128xf32> -> vector<1x128xf32>
    %53 = vector.shape_cast %47 : vector<1x1xf32> to vector<1x1xf32>
    %54 = vector.broadcast %53 : vector<1x1xf32> to vector<1x128xf32>
    %cst_25 = arith.constant 0.000000e+00 : f32
    %55 = vector.broadcast %cst_25 : f32 to vector<2x128xf32>
    %56 = tpu.concatenate %48, %49, %50, %51, %52, %54, %55 in 0 : vector<1x128xf32>, vector<1x128xf32>, vector<1x128xf32>, vector<1x128xf32>, vector<1x128xf32>, vector<1x128xf32>, vector<2x128xf32> -> vector<8x128xf32>
    %c0_26 = arith.constant 0 : index
    %c0_27 = arith.constant 0 : index
    %c0_28 = arith.constant 0 : index
    %57 = vector.load %arg4[%c0_26, %c0_27, %c0_28] : memref<1x8x128xf32, #tpu.memory_space<vmem>>, vector<1x8x128xf32>
    %58 = vector.shape_cast %56 : vector<8x128xf32> to vector<1x8x128xf32>
    %59 = arith.addf %57, %58 : vector<1x8x128xf32>
    %c0_29 = arith.constant 0 : index
    %c0_30 = arith.constant 0 : index
    %c0_31 = arith.constant 0 : index
    %60 = vector.load %arg4[%c0_29, %c0_30, %c0_31] : memref<1x8x128xf32, #tpu.memory_space<vmem>>, vector<1x8x128xf32>
    tpu.vector_store %arg4[%c0_29, %c0_30, %c0_31], %59 {strides = array<i32>} : memref<1x8x128xf32, #tpu.memory_space<vmem>>, vector<1x8x128xf32>,
    return
  }
  func.func @transform_0(%arg0: i32, %arg1: i32) -> (i32, i32) {
    %c2_i32 = arith.constant 2 : i32
    %0 = arith.muli %arg0, %c2_i32 : i32
    %1 = arith.addi %0, %arg1 : i32
    %c0_i32 = arith.constant 0 : i32
    %c0_i32_0 = arith.constant 0 : i32
    return %1, %c0_i32 : i32, i32
  }
  func.func @transform_1(%arg0: i32, %arg1: i32) -> (i32, i32) {
    %c2_i32 = arith.constant 2 : i32
    %0 = arith.muli %arg0, %c2_i32 : i32
    %1 = arith.addi %0, %arg1 : i32
    %c0_i32 = arith.constant 0 : i32
    %c0_i32_0 = arith.constant 0 : i32
    return %1, %c0_i32 : i32, i32
  }
  func.func @transform_2(%arg0: i32, %arg1: i32) -> (i32, i32, i32) {
    %c0_i32 = arith.constant 0 : i32
    %c0_i32_0 = arith.constant 0 : i32
    %c0_i32_1 = arith.constant 0 : i32
    return %arg0, %c0_i32, %c0_i32_0 : i32, i32, i32
  }
}

</mosaic_0001>

<llo_original>
// kernel: tpu_custom_call.1
$region0: #{tpu_custom_call.1}
  #allocation0 [shape = 'u32[]', space=smem, size = 0x4, offset = 0x4, fixed_abs, tag = 'smem constant byte address 0x4 - core index']
  #allocation1 [shape = 'u32[72,128]{1,0:T(1,128)}', space=vmem, size = 0x9000, scoped, tag = 'internal scratch']
  %s0 = inlined_call_operand.hbm [shape: f32[32,128], index: 0, kind: input, shape index: {}]
  %s1 = inlined_call_operand.hbm [shape: f32[32,128], index: 1, kind: input, shape index: {}]
  %s2 = inlined_call_operand.hbm [shape: f32[2,8,128], index: 2, kind: output, shape index: {}]
  %s3 = sld [smem:[#allocation0]]
  $region53: #{tpu_custom_call.1} parent=0
    _
  %s5 = ssub.s32 1, %s3
  %s6 = scalar_select 0, %s5, %s3
  $region1: #{tpu_custom_call.1} parent=0
    #allocation2 [shape = 'u8[8192]{0}', space=vmem, size = 0x2000, scoped, tag = 'input window, operand 0']
    #allocation3 [shape = 's32[2]{0}', space=sflag, size = 0x8, scoped, tag = 'scoped memory for tpu_custom_call.1']
    #allocation4 [shape = 's32[2]{0}', space=sflag, size = 0x8, scoped, tag = 'scoped memory for tpu_custom_call.1']
    #allocation5 [shape = 'u8[8192]{0}', space=vmem, size = 0x2000, scoped, tag = 'input window, operand 1']
    #allocation6 [shape = 's32[2]{0}', space=sflag, size = 0x8, scoped, tag = 'scoped memory for tpu_custom_call.1']
    #allocation7 [shape = 'u8[8192]{0}', space=vmem, size = 0x2000, scoped, tag = 'output window, operand 0']
    %7 = vsyncpa [#allocation3], 0
    %s8 = scalar_lea.sflag [#allocation3], 1
    %9 = vsyncpa %s8, 0
    %10 = vsyncpa [#allocation6], 0
    %s11 = scalar_lea.sflag [#allocation6], 1
    %12 = vsyncpa %s11, 0
    %13 = vsyncpa [#allocation4], 0
    %s14 = scalar_lea.sflag [#allocation4], 1
    %15 = vsyncpa %s14, 0
    loop: start=0, step=1, limit=6
    $region2: #{tpu_custom_call.1} parent=1 // loop_pre_header
      _
    $region3: #{tpu_custom_call.1} parent=1 // loop_header
      %s17 = sphi 0, %s21
      %p18 = scmp.ge.s32.totalorder %s17, 6
      %s24 = sphi 0, %s36
      %s25 = sphi 0, %s32
      %s26 = sphi 0, %s24
      %s27 = sphi 0, %s25
      %s28 = sphi 0, %s26
      %s29 = sphi 0, %s27
      %s43 = sphi 0, %s45
      %s46 = sphi 0, %s43
      %s47 = sphi 0, %s46
      %s63 = sphi 0, %s47
      %s73 = sphi 0, %s75
      %s76 = sphi 0, %s73
      %s77 = sphi 0, %s76
      %s93 = sphi 0, %s77
      %s99 = sphi 0, %s101
      %s102 = sphi 0, %s99
      %s103 = sphi 0, %s102
      %s119 = sphi 0, %s103
    $region4: #{tpu_custom_call.1} parent=1 // loop_header_branch
      %20 = sbr.rel (%p18) target = $region8
    $region5: #{tpu_custom_call.1} parent=1 // loop_body
      %s22 = ssub.s32 %s17, 1
      %s23 = ssub.s32 %s17, 2
      %s30 = sadd.s32 1, %s25
      %p31 = scmp.ge.s32.totalorder %s30, 2
      %s32 = scalar_select %p31, 0, %s30
      %s33 = sadd.s32 1, %s24
      %s34 = scalar_select %p31, %s33, %s24
      %p35 = scmp.ge.s32.totalorder %s34, 2
      %s36 = scalar_select %p35, 0, %s34
      %s37 = smul.u32 %s24, 2
      %s38 = sadd.s32 %s37, %s25
      %s39 = smul.u32 %s36, 2
      %s40 = sadd.s32 %s39, %s32
      %s41 = ssub.s32 %s38, %s40
      %p42 = scmp.eq.s32.totalorder %s41, 0
      %s44 = sadd.s32 %s43, 1
      %s45 = scalar_select %p42, %s43, %s44
      %p48 = pneg %p42
      %p49 = scmp.eq.s32.totalorder %s17, 3
      %p50 = por %p48, %p49
      %p51 = scmp.ne.s32.totalorder %s43, %s46
      %p52 = scmp.eq.s32.totalorder %s17, 0
      %p53 = por %p51, %p52
      %p54 = scmp.ne.s32.totalorder %s43, %s46
      %p55 = scmp.eq.s32.totalorder %s22, 3
      %p56 = por %p54, %p55
      %p57 = scmp.ne.s32.totalorder %s46, %s47
      %p58 = scmp.eq.s32.totalorder %s22, 0
      %p59 = por %p57, %p58
      %p60 = scmp.ne.s32.totalorder %s46, %s47
      %p61 = scmp.eq.s32.totalorder %s23, 3
      %p62 = por %p60, %p61
      %p64 = scmp.ne.s32.totalorder %s47, %s63
      %p65 = scmp.eq.s32.totalorder %s23, 0
      %p66 = por %p64, %p65
      %s67 = smul.u32 %s24, 2
      %s68 = sadd.s32 %s67, %s25
      %s69 = smul.u32 %s36, 2
      %s70 = sadd.s32 %s69, %s32
      %s71 = ssub.s32 %s68, %s70
      %p72 = scmp.eq.s32.totalorder %s71, 0
      %s74 = sadd.s32 %s73, 1
      %s75 = scalar_select %p72, %s73, %s74
      %p78 = pneg %p72
      %p79 = scmp.eq.s32.totalorder %s17, 3
      %p80 = por %p78, %p79
      %p81 = scmp.ne.s32.totalorder %s73, %s76
      %p82 = scmp.eq.s32.totalorder %s17, 0
      %p83 = por %p81, %p82
      %p84 = scmp.ne.s32.totalorder %s73, %s76
      %p85 = scmp.eq.s32.totalorder %s22, 3
      %p86 = por %p84, %p85
      %p87 = scmp.ne.s32.totalorder %s76, %s77
      %p88 = scmp.eq.s32.totalorder %s22, 0
      %p89 = por %p87, %p88
      %p90 = scmp.ne.s32.totalorder %s76, %s77
      %p91 = scmp.eq.s32.totalorder %s23, 3
      %p92 = por %p90, %p91
      %p94 = scmp.ne.s32.totalorder %s77, %s93
      %p95 = scmp.eq.s32.totalorder %s23, 0
      %p96 = por %p94, %p95
      %s97 = ssub.s32 %s24, %s36
      %p98 = scmp.eq.s32.totalorder %s97, 0
      %s100 = sadd.s32 %s99, 1
      %s101 = scalar_select %p98, %s99, %s100
      %p104 = pneg %p98
      %p105 = scmp.eq.s32.totalorder %s17, 3
      %p106 = por %p104, %p105
      %p107 = scmp.ne.s32.totalorder %s99, %s102
      %p108 = scmp.eq.s32.totalorder %s17, 0
      %p109 = por %p107, %p108
      %p110 = scmp.ne.s32.totalorder %s99, %s102
      %p111 = scmp.eq.s32.totalorder %s22, 3
      %p112 = por %p110, %p111
      %p113 = scmp.ne.s32.totalorder %s102, %s103
      %p114 = scmp.eq.s32.totalorder %s22, 0
      %p115 = por %p113, %p114
      %p116 = scmp.ne.s32.totalorder %s102, %s103
      %p117 = scmp.eq.s32.totalorder %s23, 3
      %p118 = por %p116, %p117
      %p120 = scmp.ne.s32.totalorder %s103, %s119
      %p121 = scmp.eq.s32.totalorder %s23, 0
      %p122 = por %p120, %p121
      %p123 = scmp.le.s32.totalorder 1, %s17
      %p124 = scmp.lt.s32.totalorder %s17, 5
      %p125 = pnand %p123, %p124
      %p126 = pneg %p125
      // Predicated region
      $region9: #{tpu_custom_call.1} parent=5 // pred_check
        _
      $region10: #{tpu_custom_call.1} parent=5 // pred_check_branch
        %128 = sbr.rel (%p125) target = $region12
      $region11: #{tpu_custom_call.1} parent=5 // pred_region
        %s129 = ssub.s32 %s17, 1
      $region12: #{tpu_custom_call.1} parent=5 // pred_fallthru
        _
      %p130 = scmp.lt.s32.totalorder %s17, 4
      // Predicated region
      $region13: #{tpu_custom_call.1} parent=5 // pred_check
        %p131 = pneg %p130
      $region14: #{tpu_custom_call.1} parent=5 // pred_check_branch
        %133 = sbr.rel (%p131) target = $region16
      $region15: #{tpu_custom_call.1} parent=5 // pred_region
        // Predicated region
        $region17: #{tpu_custom_call.1} parent=15 // pred_check
          %p134 = pneg %p53
        $region18: #{tpu_custom_call.1} parent=15 // pred_check_branch
          %136 = sbr.rel (%p134) target = $region20
        $region19: #{tpu_custom_call.1} parent=15 // pred_region
          %s137 = sand.u32 %s43, 1
          %s138 = scalar_lea.sflag [#allocation3], %s137
          %s139 = sand.u32 %s43, 1
          %s140 = smul.addr %s139, 8
          %s141 = scalar_lea.vmem [#allocation2], %s140
          %s142 = smul.u32 %s24, 2
          %s143 = sadd.s32 %s142, %s25
          %145 = vsyncadd %s138, 0
          %s146 = smul.addr %s143, 8
          %s147 = scalar_lea.hbm %s0, %s146
          %s149 = sshll.u32 %s147, 4
          %s150 = int_to_ptr.hbm [resolvable:$true] %s149
          %s151 = sshll.u32 %s141, 4
          %s152 = int_to_ptr.vmem [resolvable:$true] %s151
          %154 = dma.hbm_to_vmem [thread:$0]  %s150, 128, %s152, %s138
        $region20: #{tpu_custom_call.1} parent=15 // pred_fallthru
          _
        // Predicated region
        $region21: #{tpu_custom_call.1} parent=15 // pred_check
          %p155 = pneg %p83
        $region22: #{tpu_custom_call.1} parent=15 // pred_check_branch
          %157 = sbr.rel (%p155) target = $region24
        $region23: #{tpu_custom_call.1} parent=15 // pred_region
          %s158 = sand.u32 %s73, 1
          %s159 = scalar_lea.sflag [#allocation6], %s158
          %s160 = sand.u32 %s73, 1
          %s161 = smul.addr %s160, 8
          %s162 = scalar_lea.vmem [#allocation5], %s161
          %s163 = smul.u32 %s24, 2
          %s164 = sadd.s32 %s163, %s25
          %166 = vsyncadd %s159, 0
          %s167 = smul.addr %s164, 8
          %s168 = scalar_lea.hbm %s1, %s167
          %s170 = sshll.u32 %s168, 4
          %s171 = int_to_ptr.hbm [resolvable:$true] %s170
          %s172 = sshll.u32 %s162, 4
          %s173 = int_to_ptr.vmem [resolvable:$true] %s172
          %175 = dma.hbm_to_vmem [thread:$0]  %s171, 128, %s173, %s159
        $region24: #{tpu_custom_call.1} parent=15 // pred_fallthru
          _
      $region16: #{tpu_custom_call.1} parent=5 // pred_fallthru
        _
      %p176 = scmp.le.s32.totalorder 1, %s17
      %p177 = scmp.lt.s32.totalorder %s17, 5
      %p178 = pnand %p176, %p177
      %p179 = pneg %p178
      // Predicated region
      $region25: #{tpu_custom_call.1} parent=5 // pred_check
        _
      $region26: #{tpu_custom_call.1} parent=5 // pred_check_branch
        %181 = sbr.rel (%p178) target = $region28
      $region27: #{tpu_custom_call.1} parent=5 // pred_region
        %s182 = ssub.s32 %s17, 1
        %s183 = sand.u32 %s46, 1
        %s184 = scalar_lea.sflag [#allocation3], %s183
        %s185 = sand.u32 %s46, 1
        %s186 = smul.addr %s185, 8
        %s187 = scalar_lea.vmem [#allocation2], %s186
        // Predicated region
        $region29: #{tpu_custom_call.1} parent=27 // pred_check
          %p188 = pneg %p59
        $region30: #{tpu_custom_call.1} parent=27 // pred_check_branch
          %190 = sbr.rel (%p188) target = $region32
        $region31: #{tpu_custom_call.1} parent=27 // pred_region
          %192 = dma.done %s184, 128
        $region32: #{tpu_custom_call.1} parent=27 // pred_fallthru
          _
        %s193 = sand.u32 %s76, 1
        %s194 = scalar_lea.sflag [#allocation6], %s193
        %s195 = sand.u32 %s76, 1
        %s196 = smul.addr %s195, 8
        %s197 = scalar_lea.vmem [#allocation5], %s196
        // Predicated region
        $region33: #{tpu_custom_call.1} parent=27 // pred_check
          %p198 = pneg %p89
        $region34: #{tpu_custom_call.1} parent=27 // pred_check_branch
          %200 = sbr.rel (%p198) target = $region36
        $region35: #{tpu_custom_call.1} parent=27 // pred_region
          %202 = dma.done %s194, 128
        $region36: #{tpu_custom_call.1} parent=27 // pred_fallthru
          _
        %s203 = sand.u32 %s46, 1
        %s204 = scalar_lea.sflag [#allocation3], %s203
        %s205 = sand.u32 %s46, 1
        %s206 = smul.addr %s205, 8
        %s207 = scalar_lea.vmem [#allocation2], %s206
        %p208 = pneg %p59
        %p209 = pneg %p56
        %s210 = sand.u32 %s76, 1
        %s211 = scalar_lea.sflag [#allocation6], %s210
        %s212 = sand.u32 %s76, 1
        %s213 = smul.addr %s212, 8
        %s214 = scalar_lea.vmem [#allocation5], %s213
        %p215 = pneg %p89
        %p216 = pneg %p86
        %p217 = pneg %p115
        %p218 = pneg %p112
        %s219 = sand.u32 %s102, 1
        %s220 = scalar_lea.sflag [#allocation4], %s219
        %s221 = sand.u32 %s102, 1
        %s222 = smul.addr %s221, 8
        %s223 = scalar_lea.vmem [#allocation7], %s222
        %s224 = smul.u32 %s26, 2
        %s225 = sadd.s32 %s224, %s27
        %s226 = smul.u32 %s26, 2
        %s227 = sadd.s32 %s226, %s27
        %p228 = scmp.eq.s32.totalorder %s27, 0
        // Predicated region
        $region37: #{tpu_custom_call.1} parent=27 // pred_check
          %p229 = pneg %p228
        $region38: #{tpu_custom_call.1} parent=27 // pred_check_branch
          %231 = sbr.rel (%p229) target = $region40
        $region39: #{tpu_custom_call.1} parent=27 // pred_region
          %232 = vst [vmem:[%s223] sm:$0xff] 0.0
        $region40: #{tpu_custom_call.1} parent=27 // pred_fallthru
          _
        %v233 = vld [vmem:[%s187] sm:$0xff]
        %v234 = vld [vmem:[%s197] sm:$0xff]
        %235 = vmax.xlane.f32.xlu0 %v233
        %v236 = vpop.xlane.xlu0 %235
        %v237 = vsub.f32 %v233, %v236
        %v238 = vmul.f32 %v237, 1.442695
        %v239 = vpow.pop %v238
        %240 = vmax.xlane.f32.xlu0 %v234
        %v241 = vpop.xlane.xlu0 %240
        %v242 = vsub.f32 %v234, %v241
        %v243 = vmul.f32 %v242, 1.442695
        %v244 = vpow.pop %v243
        %245 = vmatpush.msra.mxu0 1.0
        %246 = vmatpush.msra.mxu0 1.0
        %247 = vmatpush.msra.mxu0 1.0
        %248 = vmatpush.msra.mxu0 1.0
        %249 = vmatpush.msra.mxu0 1.0
        %250 = vmatpush.msra.mxu0 1.0
        %251 = vmatpush.msra.mxu0 1.0
        %252 = vmatpush.msra.mxu0 1.0
        %253 = vmatpush.msra.mxu0 1.0
        %254 = vmatpush.msra.mxu0 1.0
        %255 = vmatpush.msra.mxu0 1.0
        %256 = vmatpush.msra.mxu0 1.0
        %257 = vmatpush.msra.mxu0 1.0
        %258 = vmatpush.msra.mxu0 1.0
        %259 = vmatpush.msra.mxu0 1.0
        %260 = vmatpush.msra.mxu0 1.0
        %261 = vmatmul.f32.gmra.mxu0 %v239
        %v262 = vpop.f32.mrf.mxu0
        %v263 = vadd.f32 0.0, %v262
        %264 = vdwg.mxu0
        %v265 = vrcp.pop %v263
        %v266 = vmul.f32 %v263, %v265
        %v267 = vsub.f32 1.0, %v266
        %v268 = vmul.f32 %v265, %v267
        %v269 = vadd.f32 %v265, %v268
        %vm270 = vweird.f32 %v263
        %vm271 = vweird.f32 %v265
        %vm272 = vmor %vm270, %vm271
        %v273 = vsel %vm272, %v265, %v269
        %v274 = vand.u32 2147483647, %v263
        %vm275 = vcmp.eq.f32.partialorder %v274, 8.507059e+37
        %v276 = vand.u32 %v263, 2147483648
        %v277 = vor.u32 1.1754944e-38, %v276
        %v278 = vsel %vm275, %v277, %v273
        %v279 = vmul.f32 1.0, %v278
        %281 = vset.pattern.permute.xlu0 0
        %282 = vperm.xlu0 %281, %v279
        %v283 = vpop.permute.xlu0 %282
        %v285 = vmul.f32 %v239, %v283
        %286 = vmatpush.msra.mxu0 1.0
        %287 = vmatpush.msra.mxu0 1.0
        %288 = vmatpush.msra.mxu0 1.0
        %289 = vmatpush.msra.mxu0 1.0
        %290 = vmatpush.msra.mxu0 1.0
        %291 = vmatpush.msra.mxu0 1.0
        %292 = vmatpush.msra.mxu0 1.0
        %293 = vmatpush.msra.mxu0 1.0
        %294 = vmatpush.msra.mxu0 1.0
        %295 = vmatpush.msra.mxu0 1.0
        %296 = vmatpush.msra.mxu0 1.0
        %297 = vmatpush.msra.mxu0 1.0
        %298 = vmatpush.msra.mxu0 1.0
        %299 = vmatpush.msra.mxu0 1.0
        %300 = vmatpush.msra.mxu0 1.0
        %301 = vmatpush.msra.mxu0 1.0
        %302 = vmatmul.f32.gmra.mxu0 %v244
        %v303 = vpop.f32.mrf.mxu0
        %v304 = vadd.f32 0.0, %v303
        %305 = vdwg.mxu0
        %v306 = vrcp.pop %v304
        %v307 = vmul.f32 %v304, %v306
        %v308 = vsub.f32 1.0, %v307
        %v309 = vmul.f32 %v306, %v308
        %v310 = vadd.f32 %v306, %v309
        %vm311 = vweird.f32 %v304
        %vm312 = vweird.f32 %v306
        %vm313 = vmor %vm311, %vm312
        %v314 = vsel %vm313, %v306, %v310
        %v315 = vand.u32 2147483647, %v304
        %vm316 = vcmp.eq.f32.partialorder %v315, 8.507059e+37
        %v317 = vand.u32 %v304, 2147483648
        %v318 = vor.u32 1.1754944e-38, %v317
        %v319 = vsel %vm316, %v318, %v314
        %v320 = vmul.f32 1.0, %v319
        %322 = vset.pattern.permute.xlu0 0
        %323 = vperm.xlu0 %322, %v320
        %v324 = vpop.permute.xlu0 %323
        %v326 = vmul.f32 %v244, %v324
        %v327 = vsub.f32 %v285, 0.0078125
        %v328 = vsub.f32 %v326, 0.0078125
        %v329 = vmul.f32 %v327, %v328
        %v330 = vmul.f32 %v327, %v327
        %v331 = vmul.f32 %v328, %v328
        %332 = vmatpush.msra.mxu0 1.0
        %333 = vmatpush.msra.mxu0 1.0
        %334 = vmatpush.msra.mxu0 1.0
        %335 = vmatpush.msra.mxu0 1.0
        %336 = vmatpush.msra.mxu0 1.0
        %337 = vmatpush.msra.mxu0 1.0
        %338 = vmatpush.msra.mxu0 1.0
        %339 = vmatpush.msra.mxu0 1.0
        %340 = vmatpush.msra.mxu0 1.0
        %341 = vmatpush.msra.mxu0 1.0
        %342 = vmatpush.msra.mxu0 1.0
        %343 = vmatpush.msra.mxu0 1.0
        %344 = vmatpush.msra.mxu0 1.0
        %345 = vmatpush.msra.mxu0 1.0
        %346 = vmatpush.msra.mxu0 1.0
        %347 = vmatpush.msra.mxu0 1.0
        %348 = vmatmul.f32.gmra.mxu0 %v329
        %v349 = vpop.f32.mrf.mxu0
        %v350 = vadd.f32 0.0, %v349
        %351 = vdwg.mxu0
        %352 = vmatpush.msra.mxu0 1.0
        %353 = vmatpush.msra.mxu0 1.0
        %354 = vmatpush.msra.mxu0 1.0
        %355 = vmatpush.msra.mxu0 1.0
        %356 = vmatpush.msra.mxu0 1.0
        %357 = vmatpush.msra.mxu0 1.0
        %358 = vmatpush.msra.mxu0 1.0
        %359 = vmatpush.msra.mxu0 1.0
        %360 = vmatpush.msra.mxu0 1.0
        %361 = vmatpush.msra.mxu0 1.0
        %362 = vmatpush.msra.mxu0 1.0
        %363 = vmatpush.msra.mxu0 1.0
        %364 = vmatpush.msra.mxu0 1.0
        %365 = vmatpush.msra.mxu0 1.0
        %366 = vmatpush.msra.mxu0 1.0
        %367 = vmatpush.msra.mxu0 1.0
        %368 = vmatmul.f32.gmra.mxu0 %v330
        %v369 = vpop.f32.mrf.mxu0
        %v370 = vadd.f32 0.0, %v369
        %371 = vdwg.mxu0
        %372 = vmatpush.msra.mxu0 1.0
        %373 = vmatpush.msra.mxu0 1.0
        %374 = vmatpush.msra.mxu0 1.0
        %375 = vmatpush.msra.mxu0 1.0
        %376 = vmatpush.msra.mxu0 1.0
        %377 = vmatpush.msra.mxu0 1.0
        %378 = vmatpush.msra.mxu0 1.0
        %379 = vmatpush.msra.mxu0 1.0
        %380 = vmatpush.msra.mxu0 1.0
        %381 = vmatpush.msra.mxu0 1.0
        %382 = vmatpush.msra.mxu0 1.0
        %383 = vmatpush.msra.mxu0 1.0
        %384 = vmatpush.msra.mxu0 1.0
        %385 = vmatpush.msra.mxu0 1.0
        %386 = vmatpush.msra.mxu0 1.0
        %387 = vmatpush.msra.mxu0 1.0
        %388 = vmatmul.f32.gmra.mxu0 %v331
        %v389 = vpop.f32.mrf.mxu0
        %v390 = vadd.f32 0.0, %v389
        %391 = vdwg.mxu0
        %v392 = vmul.f32 %v370, %v390
        %v393 = vrsqrt.pop %v392
        %v394 = vmul.f32 %v393, %v392
        %v395 = vmul.f32 %v394, %v393
        %v396 = vmul.f32 0.5, %v395
        %v397 = vsub.f32 1.5, %v396
        %v398 = vmul.f32 %v393, %v397
        %v399 = vmul.f32 %v392, %v398
        %vm400 = vcmp.eq.f32.partialorder %v392, inf
        %v401 = vsel %vm400, %v392, %v399
        %vm402 = vcmp.eq.f32.partialorder %v392, 0.0
        %v403 = vand.u32 %v392, 2147483648
        %v404 = vsel %vm402, %v403, %v401
        %v405 = vadd.f32 %v404, 1e-08
        %v406 = vrcp.pop %v405
        %v407 = vmul.f32 %v405, %v406
        %v408 = vsub.f32 1.0, %v407
        %v409 = vmul.f32 %v406, %v408
        %v410 = vadd.f32 %v406, %v409
        %vm411 = vweird.f32 %v405
        %vm412 = vweird.f32 %v406
        %vm413 = vmor %vm411, %vm412
        %v414 = vsel %vm413, %v406, %v410
        %v415 = vand.u32 2147483647, %v405
        %vm416 = vcmp.eq.f32.partialorder %v415, 8.507059e+37
        %v417 = vand.u32 %v405, 2147483648
        %v418 = vor.u32 1.1754944e-38, %v417
        %v419 = vsel %vm416, %v418, %v414
        %v420 = vmul.f32 %v350, %v419
        %vm421 = vcmask 7168
        %v422 = vsel %vm421, %v420, 0.0
        %v423 = vrot.slane %v422, 4
        %v424 = vadd.f32 %v422, %v423
        %v425 = vrot.slane %v424, 2
        %v426 = vadd.f32 %v424, %v425
        %v427 = vrot.slane %v426, 1
        %v428 = vadd.f32 %v426, %v427
        %vm429 = vcmask 64512
        %v431 = vsel %vm429, 1.0, 0
        %433 = vmatpush.msra.mxu0 0.0
        %434 = vmatpush.msra.mxu0 0.0
        %435 = vmatpush.msra.mxu0 0.0
        %436 = vmatpush.msra.mxu0 0.0
        %437 = vmatpush.msra.mxu0 0.0
        %438 = vmatpush.msra.mxu0 0.0
        %439 = vmatpush.msra.mxu0 0.0
        %440 = vmatpush.msra.mxu0 0.0
        %441 = vmatpush.msra.mxu0 0.0
        %442 = vmatpush.msra.mxu0 0.0
        %443 = vmatpush.msra.mxu0 0.0
        %444 = vmatpush.msra.mxu0 0.0
        %445 = vmatpush.msra.mxu0 0.0
        %446 = vmatpush.msra.mxu0 0.0
        %447 = vmatpush.msra.mxu0 0.0
        %448 = vmatpush.msra.mxu0 %v327
        %449 = vmatmul.f32.gmra.mxu0 %v431
        %v450 = vpop.f32.mrf.mxu0
        %v451 = vadd.f32 0.0, %v450
        %452 = vdwg.mxu0
        %453 = vmatpush.msra.mxu0 0.0
        %454 = vmatpush.msra.mxu0 0.0
        %455 = vmatpush.msra.mxu0 0.0
        %456 = vmatpush.msra.mxu0 0.0
        %457 = vmatpush.msra.mxu0 0.0
        %458 = vmatpush.msra.mxu0 0.0
        %459 = vmatpush.msra.mxu0 0.0
        %460 = vmatpush.msra.mxu0 0.0
        %461 = vmatpush.msra.mxu0 0.0
        %462 = vmatpush.msra.mxu0 0.0
        %463 = vmatpush.msra.mxu0 0.0
        %464 = vmatpush.msra.mxu0 0.0
        %465 = vmatpush.msra.mxu0 0.0
        %466 = vmatpush.msra.mxu0 0.0
        %467 = vmatpush.msra.mxu0 0.0
        %468 = vmatpush.msra.mxu0 %v328
        %469 = vmatmul.f32.gmra.mxu0 %v431
        %v470 = vpop.f32.mrf.mxu0
        %v471 = vadd.f32 0.0, %v470
        %472 = vdwg.mxu0
        %473 = vmatpush.msra.mxu0 0.0
        %474 = vmatpush.msra.mxu0 0.0
        %475 = vmatpush.msra.mxu0 0.0
        %476 = vmatpush.msra.mxu0 0.0
        %477 = vmatpush.msra.mxu0 0.0
        %478 = vmatpush.msra.mxu0 0.0
        %479 = vmatpush.msra.mxu0 0.0
        %480 = vmatpush.msra.mxu0 0.0
        %481 = vmatpush.msra.mxu0 0.0
        %482 = vmatpush.msra.mxu0 0.0
        %483 = vmatpush.msra.mxu0 0.0
        %484 = vmatpush.msra.mxu0 0.0
        %485 = vmatpush.msra.mxu0 0.0
        %486 = vmatpush.msra.mxu0 0.0
        %487 = vmatpush.msra.mxu0 0.0
        %488 = vmatpush.msra.mxu0 %v329
        %489 = vmatmul.f32.gmra.mxu0 %v431
        %v490 = vpop.f32.mrf.mxu0
        %v491 = vadd.f32 0.0, %v490
        %492 = vdwg.mxu0
        %493 = vmatpush.msra.mxu0 0.0
        %494 = vmatpush.msra.mxu0 0.0
        %495 = vmatpush.msra.mxu0 0.0
        %496 = vmatpush.msra.mxu0 0.0
        %497 = vmatpush.msra.mxu0 0.0
        %498 = vmatpush.msra.mxu0 0.0
        %499 = vmatpush.msra.mxu0 0.0
        %500 = vmatpush.msra.mxu0 0.0
        %501 = vmatpush.msra.mxu0 0.0
        %502 = vmatpush.msra.mxu0 0.0
        %503 = vmatpush.msra.mxu0 0.0
        %504 = vmatpush.msra.mxu0 0.0
        %505 = vmatpush.msra.mxu0 0.0
        %506 = vmatpush.msra.mxu0 0.0
        %507 = vmatpush.msra.mxu0 0.0
        %508 = vmatpush.msra.mxu0 %v330
        %509 = vmatmul.f32.gmra.mxu0 %v431
        %v510 = vpop.f32.mrf.mxu0
        %v511 = vadd.f32 0.0, %v510
        %512 = vdwg.mxu0
        %513 = vmatpush.msra.mxu0 0.0
        %514 = vmatpush.msra.mxu0 0.0
        %515 = vmatpush.msra.mxu0 0.0
        %516 = vmatpush.msra.mxu0 0.0
        %517 = vmatpush.msra.mxu0 0.0
        %518 = vmatpush.msra.mxu0 0.0
        %519 = vmatpush.msra.mxu0 0.0
        %520 = vmatpush.msra.mxu0 0.0
        %521 = vmatpush.msra.mxu0 0.0
        %522 = vmatpush.msra.mxu0 0.0
        %523 = vmatpush.msra.mxu0 0.0
        %524 = vmatpush.msra.mxu0 0.0
        %525 = vmatpush.msra.mxu0 0.0
        %526 = vmatpush.msra.mxu0 0.0
        %527 = vmatpush.msra.mxu0 0.0
        %528 = vmatpush.msra.mxu0 %v331
        %529 = vmatmul.f32.gmra.mxu0 %v431
        %v530 = vpop.f32.mrf.mxu0
        %v531 = vadd.f32 0.0, %v530
        %532 = vdwg.mxu0
        %534 = vset.pattern.permute.xlu0 0
        %535 = vperm.xlu0 %534, %v428
        %v536 = vpop.permute.xlu0 %535
        %v539 = vrot.slane %v471, 7
        %v542 = vrot.slane %v491, 6
        %v545 = vrot.slane %v511, 5
        %v548 = vrot.slane %v531, 4
        %vm550 = vcmask 1040384
        %v551 = vsel %vm550, %v451, %v539
        %vm552 = vcmask 1041408
        %v553 = vsel %vm552, %v551, %v542
        %vm554 = vcmask 1042432
        %v555 = vsel %vm554, %v553, %v545
        %vm556 = vcmask 1043456
        %v557 = vsel %vm556, %v555, %v548
        %vm558 = vcmask 1044480
        %v559 = vsel %vm558, %v557, %v536
        %vm560 = vcmask 1045504
        %v561 = vsel %vm560, %v559, 0.0
        %v562 = vld [vmem:[%s223] sm:$0xff]
        %v563 = vadd.f32 %v562, %v561
        %564 = vst [vmem:[%s223] sm:$0xff] %v563
        %s565 = sand.u32 %s102, 1
        %s566 = scalar_lea.sflag [#allocation4], %s565
        %s567 = sand.u32 %s102, 1
        %s568 = smul.addr %s567, 8
        %s569 = scalar_lea.vmem [#allocation7], %s568
        // Predicated region
        $region41: #{tpu_custom_call.1} parent=27 // pred_check
          %p570 = pneg %p112
        $region42: #{tpu_custom_call.1} parent=27 // pred_check_branch
          %572 = sbr.rel (%p570) target = $region44
        $region43: #{tpu_custom_call.1} parent=27 // pred_region
          %574 = vsyncadd %s566, 0
          %s575 = smul.addr %s26, 8
          %s576 = scalar_lea.hbm %s2, %s575
          %s578 = sshll.u32 %s569, 4
          %s579 = int_to_ptr.vmem [resolvable:$true] %s578
          %s580 = sshll.u32 %s576, 4
          %s581 = int_to_ptr.hbm [resolvable:$true] %s580
          %583 = dma.vmem_to_hbm [thread:$0]  %s579, 128, %s581, %s566
        $region44: #{tpu_custom_call.1} parent=27 // pred_fallthru
          _
      $region28: #{tpu_custom_call.1} parent=5 // pred_fallthru
        _
      %p584 = scmp.le.s32.totalorder 2, %s17
      // Predicated region
      $region45: #{tpu_custom_call.1} parent=5 // pred_check
        %p585 = pneg %p584
      $region46: #{tpu_custom_call.1} parent=5 // pred_check_branch
        %587 = sbr.rel (%p585) target = $region48
      $region47: #{tpu_custom_call.1} parent=5 // pred_region
        %s588 = ssub.s32 %s17, 2
        // Predicated region
        $region49: #{tpu_custom_call.1} parent=47 // pred_check
          %p589 = pneg %p118
        $region50: #{tpu_custom_call.1} parent=47 // pred_check_branch
          %591 = sbr.rel (%p589) target = $region52
        $region51: #{tpu_custom_call.1} parent=47 // pred_region
          %s592 = sand.u32 %s103, 1
          %s593 = scalar_lea.sflag [#allocation4], %s592
          %s594 = sand.u32 %s103, 1
          %s595 = smul.addr %s594, 8
          %s596 = scalar_lea.vmem [#allocation7], %s595
          %598 = dma.done %s593, 128
        $region52: #{tpu_custom_call.1} parent=47 // pred_fallthru
          _
      $region48: #{tpu_custom_call.1} parent=5 // pred_fallthru
        _
    $region6: #{tpu_custom_call.1} parent=1 // loop_footer
      %s21 = sadd.s32 1, %s17
    $region7: #{tpu_custom_call.1} parent=1 // loop_footer_branch
      %16 = sbr.rel target = $region3
    $region8: #{tpu_custom_call.1} parent=1 // loop_exit
      _
    %599 = vsyncpa [#allocation3], 1
    %s600 = scalar_lea.sflag [#allocation3], 1
    %601 = vsyncpa %s600, 1
    %602 = vsyncpa [#allocation6], 1
    %s603 = scalar_lea.sflag [#allocation6], 1
    %604 = vsyncpa %s603, 1
    %605 = vsyncpa [#allocation4], 1
    %s606 = scalar_lea.sflag [#allocation4], 1
    %607 = vsyncpa %s606, 1

</llo_original>
